<compile_context>
chip_gen: v5e
topology: v5e:2x2
jax: 0.10.0
libtpu: 0.0.40
codegen_flags: <defaults>
</compile_context>

<pallas_src>
import math

import jax
import jax.numpy as jnp
from jax.experimental import pallas as pl
from jax.experimental.pallas import tpu as pltpu

HID1 = 512
HID2 = 128


def _hnet_fused_kernel(x_ref, w1_ref, b1_ref, w2_ref, b2_ref, w3_ref, b3_ref,
                       out_ref, z_ref):
    """fc1->relu->fc2->relu->fc3->group->softmax on one (tm, D) batch tile."""
    gm, n = out_ref.shape                                              # (tm//n, n)

    x = x_ref[...]                                                     # (tm, D) bf16
    # fc1 (MXU, bf16 operands, f32 accumulate) + bias + relu (f32).
    h1 = jnp.dot(x, w1_ref[...], preferred_element_type=jnp.float32)
    h1 = jnp.maximum(h1 + b1_ref[...], 0.0)                            # dropout1 = identity
    # fc2.
    h2 = jnp.dot(h1.astype(w2_ref.dtype), w2_ref[...],
                 preferred_element_type=jnp.float32)
    h2 = jnp.maximum(h2 + b2_ref[...], 0.0)                            # dropout2 = identity
    # fc3 as VPU multiply + lane reduce; b3 is a scalar read from SMEM.
    z_ref[...] = (jnp.sum(h2 * w3_ref[...], axis=-1, keepdims=True)
                  + b3_ref[0, 0])                                      # (tm, 1) f32

    # Regroup logits (tm, 1) -> (gm, n): out[g, j] = z[g*n + j], done with n
    # sublane-strided reads from the scratch ref (no selection-matrix matmul).
    zg = jnp.concatenate(
        [z_ref[pl.ds(j, gm, stride=n), :] for j in range(n)], axis=-1)  # (gm, n)

    # Row softmax (max-subtract for stability; approx reciprocal on the EUP).
    m = jnp.max(zg, axis=-1, keepdims=True)
    e = jnp.exp(zg - m)
    out_ref[...] = e * pl.reciprocal(jnp.sum(e, axis=-1, keepdims=True), approx=True)


def _vmem_limit_bytes():
    """~112 MiB on 128-MiB-VMEM chips (v5e/v6e), ~48 MiB on v7x, safe fallback 48 MiB."""
    try:
        cap = int(pltpu.get_tpu_info().vmem_capacity_bytes)
    except Exception:
        cap = 64 * 1024 * 1024
    return max(32 * 1024 * 1024, min(cap - 16 * 1024 * 1024, 112 * 1024 * 1024))


def _pick_tile(B, n, D, max_tile, vmem_budget_bytes):
    """Pick a batch-tile size tm (and zero-padding) such that:
       * tm holds whole groups of n and keeps (tm, D) / (tm//n, n) blocks tile-aligned,
       * the per-tile intermediates (h1 f32 + bf16 copy, h2, z scratch, x buffers)
         fit the VMEM budget,
       * grid = ceil(B/tm) >= 2 whenever the batch allows it (v7x megacore)."""
    per_row = 4 * HID1 + 2 * HID1 + 4 * HID2 + 4 * 128 + 2 * 2 * D     # bytes/row estimate
    cap = max(n, int(vmem_budget_bytes) // per_row)
    unit = 8 * n                                   # whole groups + 8-sublane alignment
    small = min(cap, max_tile, B)
    if B < 2 * unit or small < unit:
        return B, 0                                # single full-array tile (grid = 1)
    tm = (small // unit) * unit
    if tm >= B:                                    # keep >= 2 grid steps
        tm = max(unit, ((B // 2) // unit) * unit)
    pad = (-B) % tm
    return tm, pad


def hnet_forward(x, params, n=8, max_tile=4096):
    """Pallas implementation of HNet.forward (eval mode)."""
    B, D = x.shape
    assert B % n == 0, "batch must be divisible by num_per_group"
    G = B // n
    w1, b1, w2, b2, w3, b3 = params

    vmem_limit = _vmem_limit_bytes()
    tm, pad = _pick_tile(B, n, D, max_tile, (vmem_limit - (4 << 20)) // 2)

    # bf16 MXU operands (f32 accumulation in-kernel); biases / fc3 row stay f32.
    x_bf = x.astype(jnp.bfloat16)
    if pad:
        x_bf = jnp.pad(x_bf, ((0, pad), (0, 0)))   # padded groups are sliced off below
    Bp = B + pad
    gm = tm // n
    grid = Bp // tm

    w1_bf = w1.astype(jnp.bfloat16)
    w2_bf = w2.astype(jnp.bfloat16)
    b1f = b1.reshape(1, HID1).astype(jnp.float32)
    b2f = b2.reshape(1, HID2).astype(jnp.float32)
    w3_row = w3.reshape(1, HID2).astype(jnp.float32)
    b3_11 = b3.reshape(1, 1).astype(jnp.float32)

    resident = lambda i: (0, 0)   # weights / constants: block index never changes

    out = pl.pallas_call(
        _hnet_fused_kernel,
        out_shape=jax.ShapeDtypeStruct((Bp // n, n), jnp.float32),
        grid=(grid,),
        in_specs=[
            pl.BlockSpec((tm, D), lambda i: (i, 0)),              # x: streamed batch tile
            pl.BlockSpec((D, HID1), resident),                    # w1
            pl.BlockSpec((1, HID1), resident),                    # b1
            pl.BlockSpec((HID1, HID2), resident),                 # w2
            pl.BlockSpec((1, HID2), resident),                    # b2
            pl.BlockSpec((1, HID2), resident),                    # w3 (row vector)
            pl.BlockSpec(memory_space=pltpu.MemorySpace.SMEM),    # b3 scalar in SMEM
        ],
        out_specs=pl.BlockSpec((gm, n), lambda i: (i, 0)),
        scratch_shapes=[pltpu.VMEM((tm, 1), jnp.float32)],        # fc3 logits (regroup source)
        compiler_params=pltpu.CompilerParams(
            dimension_semantics=("parallel",),    # v7x: shard batch tiles across 2 TCs
            vmem_limit_bytes=vmem_limit,
        ),
    )(x_bf, w1_bf, b1f, w2_bf, b2f, w3_row, b3_11)

    return out[:G] if pad else out


def init_params(key, input_dim):
    """Deterministic PyTorch-Linear-style uniform init (bound = 1/sqrt(fan_in))."""
    ks = jax.random.split(key, 6)

    def linear(kw, kb, fan_in, fan_out):
        bound = 1.0 / (fan_in ** 0.5)
        w = jax.random.uniform(kw, (fan_in, fan_out), jnp.float32, -bound, bound)
        b = jax.random.uniform(kb, (1, fan_out), jnp.float32, -bound, bound)
        return w, b

    w1, b1 = linear(ks[0], ks[1], input_dim, HID1)
    w2, b2 = linear(ks[2], ks[3], HID1, HID2)
    w3, b3 = linear(ks[4], ks[5], HID2, 1)
    return w1, b1, w2, b2, w3, b3


def _reference(x, params, n):
    """Pure-JAX reference mirroring the kernel's bf16 MXU / f32 elementwise numerics."""
    w1, b1, w2, b2, w3, b3 = params
    xb = x.astype(jnp.bfloat16)
    h1 = jnp.dot(xb, w1.astype(jnp.bfloat16), preferred_element_type=jnp.float32) + b1
    h1 = jnp.maximum(h1, 0.0)
    h2 = jnp.dot(h1.astype(jnp.bfloat16), w2.astype(jnp.bfloat16),
                 preferred_element_type=jnp.float32) + b2
    h2 = jnp.maximum(h2, 0.0)
    z = (h2 @ w3.astype(jnp.float32) + b3).reshape(-1, n)
    return jax.nn.softmax(z, axis=-1)


if __name__ == "__main__":
    key = jax.random.PRNGKey(0)
    kx, kp = jax.random.split(key)

    input_dim = 32
    n = 8          # num_per_group
    B = 16         # -> G = 2 groups

    x = jax.random.normal(kx, (B, input_dim), dtype=jnp.float32)
    params = init_params(kp, input_dim)

    out = hnet_forward(x, params, n=n)
    out = jax.block_until_ready(out)

    ref = _reference(x, params, n)
    assert out.shape == (B // n, n)
    assert jnp.allclose(out, ref, atol=2e-3, rtol=2e-3), "mismatch vs reference"

    print("KERNEL_OK")
</pallas_src>

<mosaic_0001>
module attributes {stable_mosaic.version = 11 : i64} {
  func.func @_hnet_fused_kernel(%arg0: i32, %arg1: memref<16x32xbf16, #tpu.memory_space<vmem>>, %arg2: memref<32x512xbf16, #tpu.memory_space<vmem>>, %arg3: memref<1x512xf32, #tpu.memory_space<vmem>>, %arg4: memref<512x128xbf16, #tpu.memory_space<vmem>>, %arg5: memref<1x128xf32, #tpu.memory_space<vmem>>, %arg6: memref<1x128xf32, #tpu.memory_space<vmem>>, %arg7: memref<1x1xf32, #tpu.memory_space<smem>>, %arg8: memref<2x8xf32, #tpu.memory_space<vmem>>, %arg9: memref<16x1xf32, #tpu.memory_space<vmem>>) attributes {dimension_semantics = [#tpu.dimension_semantics<parallel>], iteration_bounds = array<i64: 1>, scalar_prefetch = 0 : i64, scratch_operands = 1 : i64, tpu.core_type = #tpu.core_type<tc>, window_params = [{transform_indices = @transform_0, window_bounds = array<i64: 16, 32>}, {pipeline_mode = #tpu.pipeline_mode<synchronous>, transform_indices = @transform_1, window_bounds = array<i64: 32, 512>}, {pipeline_mode = #tpu.pipeline_mode<synchronous>, transform_indices = @transform_2, window_bounds = array<i64: 1, 512>}, {pipeline_mode = #tpu.pipeline_mode<synchronous>, transform_indices = @transform_3, window_bounds = array<i64: 512, 128>}, {pipeline_mode = #tpu.pipeline_mode<synchronous>, transform_indices = @transform_4, window_bounds = array<i64: 1, 128>}, {pipeline_mode = #tpu.pipeline_mode<synchronous>, transform_indices = @transform_5, window_bounds = array<i64: 1, 128>}, {transform_indices = @transform_6, window_bounds = array<i64: 1, 1>}, {transform_indices = @transform_7, window_bounds = array<i64: 2, 8>}]} {
    %c0 = arith.constant 0 : index
    %c0_0 = arith.constant 0 : index
    %0 = vector.load %arg1[%c0, %c0_0] : memref<16x32xbf16, #tpu.memory_space<vmem>>, vector<16x32xbf16>
    %c0_1 = arith.constant 0 : index
    %c0_2 = arith.constant 0 : index
    %1 = vector.load %arg2[%c0_1, %c0_2] : memref<32x512xbf16, #tpu.memory_space<vmem>>, vector<32x512xbf16>
    %cst = arith.constant dense<0.000000e+00> : vector<16x512xf32>
    %2 = tpu.matmul %0, %1, %cst {dimension_numbers = #tpu.dot_dimension_numbers<[1], [0], [0], [1], [0, 0, 1, 1], [], []>} : vector<16x32xbf16>, vector<32x512xbf16>, vector<16x512xf32> -> vector<16x512xf32>
    %c0_3 = arith.constant 0 : index
    %c0_4 = arith.constant 0 : index
    %3 = vector.load %arg3[%c0_3, %c0_4] : memref<1x512xf32, #tpu.memory_space<vmem>>, vector<1x512xf32>
    %4 = vector.broadcast %3 : vector<1x512xf32> to vector<16x512xf32>
    %5 = arith.addf %2, %4 : vector<16x512xf32>
    %cst_5 = arith.constant 0.000000e+00 : f32
    %6 = vector.broadcast %cst_5 : f32 to vector<16x512xf32>
    %7 = arith.maximumf %5, %6 : vector<16x512xf32>
    %8 = arith.truncf %7 : vector<16x512xf32> to vector<16x512xbf16>
    %c0_6 = arith.constant 0 : index
    %c0_7 = arith.constant 0 : index
    %9 = vector.load %arg4[%c0_6, %c0_7] : memref<512x128xbf16, #tpu.memory_space<vmem>>, vector<512x128xbf16>
    %cst_8 = arith.constant dense<0.000000e+00> : vector<16x128xf32>
    %10 = tpu.matmul %8, %9, %cst_8 {dimension_numbers = #tpu.dot_dimension_numbers<[1], [0], [0], [1], [0, 0, 1, 1], [], []>} : vector<16x512xbf16>, vector<512x128xbf16>, vector<16x128xf32> -> vector<16x128xf32>
    %c0_9 = arith.constant 0 : index
    %c0_10 = arith.constant 0 : index
    %11 = vector.load %arg5[%c0_9, %c0_10] : memref<1x128xf32, #tpu.memory_space<vmem>>, vector<1x128xf32>
    %12 = vector.broadcast %11 : vector<1x128xf32> to vector<16x128xf32>
    %13 = arith.addf %10, %12 : vector<16x128xf32>
    %cst_11 = arith.constant 0.000000e+00 : f32
    %14 = vector.broadcast %cst_11 : f32 to vector<16x128xf32>
    %15 = arith.maximumf %13, %14 : vector<16x128xf32>
    %c0_12 = arith.constant 0 : index
    %c0_13 = arith.constant 0 : index
    %16 = vector.load %arg6[%c0_12, %c0_13] : memref<1x128xf32, #tpu.memory_space<vmem>>, vector<1x128xf32>
    %17 = vector.broadcast %16 : vector<1x128xf32> to vector<16x128xf32>
    %18 = arith.mulf %15, %17 : vector<16x128xf32>
    %cst_14 = arith.constant dense<0.000000e+00> : vector<16xf32>
    %19 = vector.multi_reduction <add>, %18, %cst_14 [1] : vector<16x128xf32> to vector<16xf32>
    %20 = vector.shape_cast %19 : vector<16xf32> to vector<16x1xf32>
    %c0_15 = arith.constant 0 : index
    %c0_16 = arith.constant 0 : index
    %21 = memref.load %arg7[%c0_15, %c0_16] : memref<1x1xf32, #tpu.memory_space<smem>>
    %22 = vector.broadcast %21 : f32 to vector<16x1xf32>
    %23 = arith.addf %20, %22 : vector<16x1xf32>
    %c0_17 = arith.constant 0 : index
    %c0_18 = arith.constant 0 : index
    %24 = vector.load %arg9[%c0_17, %c0_18] : memref<16x1xf32, #tpu.memory_space<vmem>>, vector<16x1xf32>
    tpu.vector_store %arg9[%c0_17, %c0_18], %23 {strides = array<i32>} : memref<16x1xf32, #tpu.memory_space<vmem>>, vector<16x1xf32>,
    %c0_19 = arith.constant 0 : index
    %c0_20 = arith.constant 0 : index
    %25 = tpu.strided_load %arg9[%c0_19, %c0_20] {strides = array<i32: 8, 1>} : memref<16x1xf32, #tpu.memory_space<vmem>>, vector<2x1xf32>
    %c1 = arith.constant 1 : index
    %c0_21 = arith.constant 0 : index
    %26 = tpu.strided_load %arg9[%c1, %c0_21] {strides = array<i32: 8, 1>} : memref<16x1xf32, #tpu.memory_space<vmem>>, vector<2x1xf32>
    %c2 = arith.constant 2 : index
    %c0_22 = arith.constant 0 : index
    %27 = tpu.strided_load %arg9[%c2, %c0_22] {strides = array<i32: 8, 1>} : memref<16x1xf32, #tpu.memory_space<vmem>>, vector<2x1xf32>
    %c3 = arith.constant 3 : index
    %c0_23 = arith.constant 0 : index
    %28 = tpu.strided_load %arg9[%c3, %c0_23] {strides = array<i32: 8, 1>} : memref<16x1xf32, #tpu.memory_space<vmem>>, vector<2x1xf32>
    %c4 = arith.constant 4 : index
    %c0_24 = arith.constant 0 : index
    %29 = tpu.strided_load %arg9[%c4, %c0_24] {strides = array<i32: 8, 1>} : memref<16x1xf32, #tpu.memory_space<vmem>>, vector<2x1xf32>
    %c5 = arith.constant 5 : index
    %c0_25 = arith.constant 0 : index
    %30 = tpu.strided_load %arg9[%c5, %c0_25] {strides = array<i32: 8, 1>} : memref<16x1xf32, #tpu.memory_space<vmem>>, vector<2x1xf32>
    %c6 = arith.constant 6 : index
    %c0_26 = arith.constant 0 : index
    %31 = tpu.strided_load %arg9[%c6, %c0_26] {strides = array<i32: 8, 1>} : memref<16x1xf32, #tpu.memory_space<vmem>>, vector<2x1xf32>
    %c7 = arith.constant 7 : index
    %c0_27 = arith.constant 0 : index
    %32 = tpu.strided_load %arg9[%c7, %c0_27] {strides = array<i32: 8, 1>} : memref<16x1xf32, #tpu.memory_space<vmem>>, vector<2x1xf32>
    %33 = tpu.concatenate %25, %26, %27, %28, %29, %30, %31, %32 in 1 : vector<2x1xf32>, vector<2x1xf32>, vector<2x1xf32>, vector<2x1xf32>, vector<2x1xf32>, vector<2x1xf32>, vector<2x1xf32>, vector<2x1xf32> -> vector<2x8xf32>
    %cst_28 = arith.constant dense<0xFF800000> : vector<2xf32>
    %34 = vector.multi_reduction <maximumf>, %33, %cst_28 [1] : vector<2x8xf32> to vector<2xf32>
    %35 = vector.shape_cast %34 : vector<2xf32> to vector<2x1xf32>
    %36 = vector.broadcast %35 : vector<2x1xf32> to vector<2x8xf32>
    %37 = arith.subf %33, %36 : vector<2x8xf32>
    %38 = math.exp %37 : vector<2x8xf32>
    %cst_29 = arith.constant dense<0.000000e+00> : vector<2xf32>
    %39 = vector.multi_reduction <add>, %38, %cst_29 [1] : vector<2x8xf32> to vector<2xf32>
    %40 = vector.shape_cast %39 : vector<2xf32> to vector<2x1xf32>
    %41 = tpu.reciprocal %40 {approx = true} : vector<2x1xf32> -> vector<2x1xf32>
    %42 = vector.broadcast %41 : vector<2x1xf32> to vector<2x8xf32>
    %43 = arith.mulf %38, %42 : vector<2x8xf32>
    %c0_30 = arith.constant 0 : index
    %c0_31 = arith.constant 0 : index
    %44 = vector.load %arg8[%c0_30, %c0_31] : memref<2x8xf32, #tpu.memory_space<vmem>>, vector<2x8xf32>
    tpu.vector_store %arg8[%c0_30, %c0_31], %43 {strides = array<i32>} : memref<2x8xf32, #tpu.memory_space<vmem>>, vector<2x8xf32>,
    return
  }
  func.func @transform_0(%arg0: i32) -> (i32, i32) {
    %c0_i32 = arith.constant 0 : i32
    %c0_i32_0 = arith.constant 0 : i32
    return %arg0, %c0_i32 : i32, i32
  }
  func.func @transform_1(%arg0: i32) -> (i32, i32) {
    %c0_i32 = arith.constant 0 : i32
    %c0_i32_0 = arith.constant 0 : i32
    %c0_i32_1 = arith.constant 0 : i32
    return %c0_i32, %c0_i32_0 : i32, i32
  }
  func.func @transform_2(%arg0: i32) -> (i32, i32) {
    %c0_i32 = arith.constant 0 : i32
    %c0_i32_0 = arith.constant 0 : i32
    %c0_i32_1 = arith.constant 0 : i32
    return %c0_i32, %c0_i32_0 : i32, i32
  }
  func.func @transform_3(%arg0: i32) -> (i32, i32) {
    %c0_i32 = arith.constant 0 : i32
    %c0_i32_0 = arith.constant 0 : i32
    %c0_i32_1 = arith.constant 0 : i32
    return %c0_i32, %c0_i32_0 : i32, i32
  }
  func.func @transform_4(%arg0: i32) -> (i32, i32) {
    %c0_i32 = arith.constant 0 : i32
    %c0_i32_0 = arith.constant 0 : i32
    %c0_i32_1 = arith.constant 0 : i32
    return %c0_i32, %c0_i32_0 : i32, i32
  }
  func.func @transform_5(%arg0: i32) -> (i32, i32) {
    %c0_i32 = arith.constant 0 : i32
    %c0_i32_0 = arith.constant 0 : i32
    %c0_i32_1 = arith.constant 0 : i32
    return %c0_i32, %c0_i32_0 : i32, i32
  }
  func.func @transform_6(%arg0: i32) -> (i32, i32) {
    %c0_i32 = arith.constant 0 : i32
    %c0_i32_0 = arith.constant 0 : i32
    %c0_i32_1 = arith.constant 0 : i32
    return %c0_i32, %c0_i32_0 : i32, i32
  }
  func.func @transform_7(%arg0: i32) -> (i32, i32) {
    %c0_i32 = arith.constant 0 : i32
    %c0_i32_0 = arith.constant 0 : i32
    return %arg0, %c0_i32 : i32, i32
  }
}

</mosaic_0001>

<llo_original>
// kernel: tpu_custom_call.1
$region0: #{tpu_custom_call.1}
  #allocation0 [shape = 'u32[]', space=smem, size = 0x4, offset = 0x4, fixed_abs, tag = 'smem constant byte address 0x4 - core index']
  #allocation1 [shape = 'u32[72,128]{1,0:T(1,128)}', space=vmem, size = 0x9000, scoped, tag = 'internal scratch']
  #allocation2 [shape = 'f32[16,1]{1,0:T(8,128)}', space=vmem, size = 0x2000, scoped, tag = 'scratch operand']
  #allocation3 [shape = 'f32[1,1]{1,0:T(1,128)S(6)}', space=smem, size = 0x200, scoped, tag = 'scoped memory for tpu_custom_call.1']
  %s0 = inlined_call_operand.hbm [shape: bf16[16,32], index: 0, kind: input, shape index: {}]
  %s1 = inlined_call_operand.hbm [shape: bf16[32,512], index: 1, kind: input, shape index: {}]
  %s2 = inlined_call_operand.hbm [shape: f32[1,512], index: 2, kind: input, shape index: {}]
  %s3 = inlined_call_operand.hbm [shape: bf16[512,128], index: 3, kind: input, shape index: {}]
  %s4 = inlined_call_operand.vmem [shape: f32[1,128], index: 4, kind: input, shape index: {}]
  %s5 = inlined_call_operand.vmem [shape: f32[1,128], index: 5, kind: input, shape index: {}]
  %s6 = inlined_call_operand.<no memory space> [shape: f32[1,1], index: 6, kind: input, shape index: {}]
  %s7 = inlined_call_operand.hbm [shape: f32[2,8], index: 7, kind: output, shape index: {}]
  %s8 = sld [smem:[#allocation0]]
  $region54: #{tpu_custom_call.1} parent=0
    _
  %s10 = ssub.s32 1, %s8
  %s11 = scalar_select 0, %s10, %s8
  %12 = sst [smem:[#allocation3]] %s6
  $region1: #{tpu_custom_call.1} parent=0
    #allocation4 [shape = 'u8[4096]{0}', space=vmem, size = 0x1000, scoped, tag = 'input window, operand 0, single buffered']
    #allocation5 [shape = 's32[1]{0}', space=sflag, size = 0x4, scoped, tag = 'scoped memory for tpu_custom_call.1']
    #allocation6 [shape = 's32[1]{0}', space=sflag, size = 0x4, scoped, tag = 'scoped memory for tpu_custom_call.1']
    #allocation7 [shape = 'u8[32768]{0}', space=vmem, size = 0x8000, scoped, tag = 'input window, operand 1, single buffered']
    #allocation8 [shape = 's32[1]{0}', space=sflag, size = 0x4, scoped, tag = 'scoped memory for tpu_custom_call.1']
    #allocation9 [shape = 'u8[2048]{0}', space=vmem, size = 0x800, scoped, tag = 'input window, operand 2, single buffered']
    #allocation10 [shape = 'u8[131072]{0}', space=vmem, size = 0x20000, scoped, tag = 'input window, operand 3, single buffered']
    #allocation11 [shape = 's32[1]{0}', space=sflag, size = 0x4, scoped, tag = 'scoped memory for tpu_custom_call.1']
    #allocation12 [shape = 'u8[1024]{0}', space=vmem, size = 0x400, scoped, tag = 'output window, operand 0, single buffered']
    %13 = vsyncpa [#allocation5], 0
    %14 = vsyncpa [#allocation8], 0
    %15 = vsyncpa [#allocation11], 0
    %16 = vsyncpa [#allocation6], 0
    // Predicated region
    $region2: #{tpu_custom_call.1} parent=1 // pred_check
      _
    $region3: #{tpu_custom_call.1} parent=1 // pred_check_branch
      %18 = sbr.rel (0) target = $region5
    $region4: #{tpu_custom_call.1} parent=1 // pred_region
      %20 = vsyncadd [#allocation5], 0
      %s21 = sshll.u32 %s0, 4
      %s22 = int_to_ptr.hbm [resolvable:$true] %s21
      %s23 = sshll.u32 [#allocation4], 4
      %s24 = int_to_ptr.vmem [resolvable:$true] %s23
      %29 = dma.hbm_to_vmem [thread:$0]  %s22, 128, %s24, [#allocation5], 64, 64, 4
    $region5: #{tpu_custom_call.1} parent=1 // pred_fallthru
      _
    // Predicated region
    $region6: #{tpu_custom_call.1} parent=1 // pred_check
      _
    $region7: #{tpu_custom_call.1} parent=1 // pred_check_branch
      %31 = sbr.rel (0) target = $region9
    $region8: #{tpu_custom_call.1} parent=1 // pred_region
      %33 = vsyncadd [#allocation8], 0
      %s34 = sshll.u32 %s1, 4
      %s35 = int_to_ptr.hbm [resolvable:$true] %s34
      %s36 = sshll.u32 [#allocation7], 4
      %s37 = int_to_ptr.vmem [resolvable:$true] %s36
      %42 = dma.hbm_to_vmem [thread:$0]  %s35, 1024, %s37, [#allocation8], 256, 256, 16
    $region9: #{tpu_custom_call.1} parent=1 // pred_fallthru
      _
    // Predicated region
    $region10: #{tpu_custom_call.1} parent=1 // pred_check
      _
    $region11: #{tpu_custom_call.1} parent=1 // pred_check_branch
      %44 = sbr.rel (0) target = $region13
    $region12: #{tpu_custom_call.1} parent=1 // pred_region
      %46 = vsyncadd [#allocation8], 0
      %s48 = sshll.u32 %s2, 4
      %s49 = int_to_ptr.hbm [resolvable:$true] %s48
      %s50 = sshll.u32 [#allocation9], 4
      %s51 = int_to_ptr.vmem [resolvable:$true] %s50
      %53 = dma.hbm_to_vmem [thread:$0]  %s49, 64, %s51, [#allocation8]
    $region13: #{tpu_custom_call.1} parent=1 // pred_fallthru
      _
    // Predicated region
    $region14: #{tpu_custom_call.1} parent=1 // pred_check
      _
    $region15: #{tpu_custom_call.1} parent=1 // pred_check_branch
      %55 = sbr.rel (0) target = $region17
    $region16: #{tpu_custom_call.1} parent=1 // pred_region
      %57 = vsyncadd [#allocation11], 0
      %s58 = sshll.u32 %s3, 4
      %s59 = int_to_ptr.hbm [resolvable:$true] %s58
      %s60 = sshll.u32 [#allocation10], 4
      %s61 = int_to_ptr.vmem [resolvable:$true] %s60
      %66 = dma.hbm_to_vmem [thread:$0]  %s59, 4096, %s61, [#allocation11], 64, 64, 4
    $region17: #{tpu_custom_call.1} parent=1 // pred_fallthru
      _
    // Predicated region
    $region18: #{tpu_custom_call.1} parent=1 // pred_check
      _
    $region19: #{tpu_custom_call.1} parent=1 // pred_check_branch
      %68 = sbr.rel (0) target = $region21
    $region20: #{tpu_custom_call.1} parent=1 // pred_region
      _
    $region21: #{tpu_custom_call.1} parent=1 // pred_fallthru
      _
    // Predicated region
    $region22: #{tpu_custom_call.1} parent=1 // pred_check
      _
    $region23: #{tpu_custom_call.1} parent=1 // pred_check_branch
      %70 = sbr.rel (0) target = $region25
    $region24: #{tpu_custom_call.1} parent=1 // pred_region
      _
    $region25: #{tpu_custom_call.1} parent=1 // pred_fallthru
      _
    // Predicated region
    $region26: #{tpu_custom_call.1} parent=1 // pred_check
      _
    $region27: #{tpu_custom_call.1} parent=1 // pred_check_branch
      %72 = sbr.rel (0) target = $region29
    $region28: #{tpu_custom_call.1} parent=1 // pred_region
      _
    $region29: #{tpu_custom_call.1} parent=1 // pred_fallthru
      _
    // Predicated region
    $region30: #{tpu_custom_call.1} parent=1 // pred_check
      _
    $region31: #{tpu_custom_call.1} parent=1 // pred_check_branch
      %74 = sbr.rel (0) target = $region33
    $region32: #{tpu_custom_call.1} parent=1 // pred_region
      %76 = dma.done [#allocation5], 128
    $region33: #{tpu_custom_call.1} parent=1 // pred_fallthru
      _
    // Predicated region
    $region34: #{tpu_custom_call.1} parent=1 // pred_check
      _
    $region35: #{tpu_custom_call.1} parent=1 // pred_check_branch
      %78 = sbr.rel (0) target = $region37
    $region36: #{tpu_custom_call.1} parent=1 // pred_region
      %80 = dma.done [#allocation8], 1024
    $region37: #{tpu_custom_call.1} parent=1 // pred_fallthru
      _
    // Predicated region
    $region38: #{tpu_custom_call.1} parent=1 // pred_check
      _
    $region39: #{tpu_custom_call.1} parent=1 // pred_check_branch
      %82 = sbr.rel (0) target = $region41
    $region40: #{tpu_custom_call.1} parent=1 // pred_region
      %84 = dma.done [#allocation8], 64
    $region41: #{tpu_custom_call.1} parent=1 // pred_fallthru
      _
    // Predicated region
    $region42: #{tpu_custom_call.1} parent=1 // pred_check
      _
    $region43: #{tpu_custom_call.1} parent=1 // pred_check_branch
      %86 = sbr.rel (0) target = $region45
    $region44: #{tpu_custom_call.1} parent=1 // pred_region
      %88 = dma.done [#allocation11], 4096
    $region45: #{tpu_custom_call.1} parent=1 // pred_fallthru
      _
    %v90 = vld [vmem:[#allocation4] sm:$0xf]
    %v91 = vld [vmem:[#allocation4 + $0x4] sm:$0xf]
    %v92 = vld [vmem:[#allocation7] sm:$0xff]
    %v93 = vld [vmem:[#allocation7 + $0x8] sm:$0xff]
    %v94 = vld [vmem:[#allocation7 + $0x10] sm:$0xff]
    %v95 = vld [vmem:[#allocation7 + $0x18] sm:$0xff]
    %v96 = vld [vmem:[#allocation7 + $0x20] sm:$0xff]
    %v97 = vld [vmem:[#allocation7 + $0x28] sm:$0xff]
    %v98 = vld [vmem:[#allocation7 + $0x30] sm:$0xff]
    %v99 = vld [vmem:[#allocation7 + $0x38] sm:$0xff]
    %v100 = vld [vmem:[#allocation9] sm:$0xf]
    %v102 = vperm.slane %v100, 0
    %v103 = vperm.slane %v100, 1
    %v104 = vperm.slane %v100, 2
    %v105 = vperm.slane %v100, 3
    %v112 = vunpack.c.l.b16 %v90
    %v113 = vunpack.c.l.b16 %v91
    %v114 = vpack.c.b16 %v113, %v112
    %v123 = vunpack.c.l.b16 %v92
    %v124 = vunpack.c.h.b16 %v92
    %v125 = vunpack.c.l.b16 %v93
    %v126 = vunpack.c.h.b16 %v93
    %v127 = vunpack.c.l.b16 %v94
    %v128 = vunpack.c.h.b16 %v94
    %v129 = vunpack.c.l.b16 %v95
    %v130 = vunpack.c.h.b16 %v95
    %v131 = vunpack.c.l.b16 %v96
    %v132 = vunpack.c.h.b16 %v96
    %v133 = vunpack.c.l.b16 %v97
    %v134 = vunpack.c.h.b16 %v97
    %v135 = vunpack.c.l.b16 %v98
    %v136 = vunpack.c.h.b16 %v98
    %v137 = vunpack.c.l.b16 %v99
    %v138 = vunpack.c.h.b16 %v99
    %v139 = vpack.c.b16 %v127, %v123
    %v140 = vpack.c.b16 %v128, %v124
    %v141 = vpack.c.b16 %v129, %v125
    %v142 = vpack.c.b16 %v130, %v126
    %v143 = vpack.c.b16 %v135, %v131
    %v144 = vpack.c.b16 %v136, %v132
    %v145 = vpack.c.b16 %v137, %v133
    %v146 = vpack.c.b16 %v138, %v134
    %vm155 = vcmask 261120
    %v157 = vsel %vm155, %v114, 0
    %159 = vmatpush.bf16.msra.mxu0 0
    %160 = vmatpush.bf16.msra.mxu0 0
    %161 = vmatpush.bf16.msra.mxu0 0
    %162 = vmatpush.bf16.msra.mxu0 0
    %163 = vmatpush.bf16.msra.mxu0 0
    %164 = vmatpush.bf16.msra.mxu0 0
    %165 = vmatpush.bf16.msra.mxu0 %v143
    %166 = vmatpush.bf16.msra.mxu0 %v139
    %167 = vmatmul.bf16.gmra.mxu0 %v157
    %v168 = vpop.f32.mrf.mxu0
    %v169 = vadd.f32 %v102, %v168
    %v170 = vpop.f32.mrf.mxu0
    %v171 = vadd.f32 %v102, %v170
    %172 = vdwg.mxu0
    %173 = vmatpush.bf16.msra.mxu0 0
    %174 = vmatpush.bf16.msra.mxu0 0
    %175 = vmatpush.bf16.msra.mxu0 0
    %176 = vmatpush.bf16.msra.mxu0 0
    %177 = vmatpush.bf16.msra.mxu0 0
    %178 = vmatpush.bf16.msra.mxu0 0
    %179 = vmatpush.bf16.msra.mxu0 %v144
    %180 = vmatpush.bf16.msra.mxu0 %v140
    %181 = vmatmul.bf16.gmra.mxu0 %v157
    %v182 = vpop.f32.mrf.mxu0
    %v183 = vadd.f32 %v103, %v182
    %v184 = vpop.f32.mrf.mxu0
    %v185 = vadd.f32 %v103, %v184
    %186 = vdwg.mxu0
    %187 = vmatpush.bf16.msra.mxu0 0
    %188 = vmatpush.bf16.msra.mxu0 0
    %189 = vmatpush.bf16.msra.mxu0 0
    %190 = vmatpush.bf16.msra.mxu0 0
    %191 = vmatpush.bf16.msra.mxu0 0
    %192 = vmatpush.bf16.msra.mxu0 0
    %193 = vmatpush.bf16.msra.mxu0 %v145
    %194 = vmatpush.bf16.msra.mxu0 %v141
    %195 = vmatmul.bf16.gmra.mxu0 %v157
    %v196 = vpop.f32.mrf.mxu0
    %v197 = vadd.f32 %v104, %v196
    %v198 = vpop.f32.mrf.mxu0
    %v199 = vadd.f32 %v104, %v198
    %200 = vdwg.mxu0
    %201 = vmatpush.bf16.msra.mxu0 0
    %202 = vmatpush.bf16.msra.mxu0 0
    %203 = vmatpush.bf16.msra.mxu0 0
    %204 = vmatpush.bf16.msra.mxu0 0
    %205 = vmatpush.bf16.msra.mxu0 0
    %206 = vmatpush.bf16.msra.mxu0 0
    %207 = vmatpush.bf16.msra.mxu0 %v146
    %208 = vmatpush.bf16.msra.mxu0 %v142
    %209 = vmatmul.bf16.gmra.mxu0 %v157
    %v210 = vpop.f32.mrf.mxu0
    %v211 = vadd.f32 %v105, %v210
    %v212 = vpop.f32.mrf.mxu0
    %v213 = vadd.f32 %v105, %v212
    %214 = vdwg.mxu0
    %v215 = vmax.f32 %v169, 0.0
    %v216 = vmax.f32 %v183, 0.0
    %v217 = vmax.f32 %v197, 0.0
    %v218 = vmax.f32 %v211, 0.0
    %v219 = vmax.f32 %v171, 0.0
    %v220 = vmax.f32 %v185, 0.0
    %v221 = vmax.f32 %v199, 0.0
    %v222 = vmax.f32 %v213, 0.0
    %v223 = vpack.c.bf16 %v219, %v215
    %v224 = vpack.c.bf16 %v220, %v216
    %v225 = vpack.c.bf16 %v221, %v217
    %v226 = vpack.c.bf16 %v222, %v218
    %v227 = vld [vmem:[#allocation10] sm:$0xf]
    %v228 = vld [vmem:[#allocation10 + $0x4] sm:$0xf]
    %v229 = vld [vmem:[#allocation10 + $0x8] sm:$0xf]
    %v230 = vld [vmem:[#allocation10 + $0xc] sm:$0xf]
    %v231 = vld [vmem:[#allocation10 + $0x10] sm:$0xf]
    %v232 = vld [vmem:[#allocation10 + $0x14] sm:$0xf]
    %v233 = vld [vmem:[#allocation10 + $0x18] sm:$0xf]
    %v234 = vld [vmem:[#allocation10 + $0x1c] sm:$0xf]
    %v235 = vld [vmem:[#allocation10 + $0x20] sm:$0xf]
    %v236 = vld [vmem:[#allocation10 + $0x24] sm:$0xf]
    %v237 = vld [vmem:[#allocation10 + $0x28] sm:$0xf]
    %v238 = vld [vmem:[#allocation10 + $0x2c] sm:$0xf]
    %v239 = vld [vmem:[#allocation10 + $0x30] sm:$0xf]
    %v240 = vld [vmem:[#allocation10 + $0x34] sm:$0xf]
    %v241 = vld [vmem:[#allocation10 + $0x38] sm:$0xf]
    %v242 = vld [vmem:[#allocation10 + $0x3c] sm:$0xf]
    %v243 = vld [vmem:[#allocation10 + $0x40] sm:$0xf]
    %v244 = vld [vmem:[#allocation10 + $0x44] sm:$0xf]
    %v245 = vld [vmem:[#allocation10 + $0x48] sm:$0xf]
    %v246 = vld [vmem:[#allocation10 + $0x4c] sm:$0xf]
    %v247 = vld [vmem:[#allocation10 + $0x50] sm:$0xf]
    %v248 = vld [vmem:[#allocation10 + $0x54] sm:$0xf]
    %v249 = vld [vmem:[#allocation10 + $0x58] sm:$0xf]
    %v250 = vld [vmem:[#allocation10 + $0x5c] sm:$0xf]
    %v251 = vld [vmem:[#allocation10 + $0x60] sm:$0xf]
    %v252 = vld [vmem:[#allocation10 + $0x64] sm:$0xf]
    %v253 = vld [vmem:[#allocation10 + $0x68] sm:$0xf]
    %v254 = vld [vmem:[#allocation10 + $0x6c] sm:$0xf]
    %v255 = vld [vmem:[#allocation10 + $0x70] sm:$0xf]
    %v256 = vld [vmem:[#allocation10 + $0x74] sm:$0xf]
    %v257 = vld [vmem:[#allocation10 + $0x78] sm:$0xf]
    %v258 = vld [vmem:[#allocation10 + $0x7c] sm:$0xf]
    %v259 = vld [vmem:[#allocation10 + $0x80] sm:$0xf]
    %v260 = vld [vmem:[#allocation10 + $0x84] sm:$0xf]
    %v261 = vld [vmem:[#allocation10 + $0x88] sm:$0xf]
    %v262 = vld [vmem:[#allocation10 + $0x8c] sm:$0xf]
    %v263 = vld [vmem:[#allocation10 + $0x90] sm:$0xf]
    %v264 = vld [vmem:[#allocation10 + $0x94] sm:$0xf]
    %v265 = vld [vmem:[#allocation10 + $0x98] sm:$0xf]
    %v266 = vld [vmem:[#allocation10 + $0x9c] sm:$0xf]
    %v267 = vld [vmem:[#allocation10 + $0xa0] sm:$0xf]
    %v268 = vld [vmem:[#allocation10 + $0xa4] sm:$0xf]
    %v269 = vld [vmem:[#allocation10 + $0xa8] sm:$0xf]
    %v270 = vld [vmem:[#allocation10 + $0xac] sm:$0xf]
    %v271 = vld [vmem:[#allocation10 + $0xb0] sm:$0xf]
    %v272 = vld [vmem:[#allocation10 + $0xb4] sm:$0xf]
    %v273 = vld [vmem:[#allocation10 + $0xb8] sm:$0xf]
    %v274 = vld [vmem:[#allocation10 + $0xbc] sm:$0xf]
    %v275 = vld [vmem:[#allocation10 + $0xc0] sm:$0xf]
    %v276 = vld [vmem:[#allocation10 + $0xc4] sm:$0xf]
    %v277 = vld [vmem:[#allocation10 + $0xc8] sm:$0xf]
    %v278 = vld [vmem:[#allocation10 + $0xcc] sm:$0xf]
    %v279 = vld [vmem:[#allocation10 + $0xd0] sm:$0xf]
    %v280 = vld [vmem:[#allocation10 + $0xd4] sm:$0xf]
    %v281 = vld [vmem:[#allocation10 + $0xd8] sm:$0xf]
    %v282 = vld [vmem:[#allocation10 + $0xdc] sm:$0xf]
    %v283 = vld [vmem:[#allocation10 + $0xe0] sm:$0xf]
    %v284 = vld [vmem:[#allocation10 + $0xe4] sm:$0xf]
    %v285 = vld [vmem:[#allocation10 + $0xe8] sm:$0xf]
    %v286 = vld [vmem:[#allocation10 + $0xec] sm:$0xf]
    %v287 = vld [vmem:[#allocation10 + $0xf0] sm:$0xf]
    %v288 = vld [vmem:[#allocation10 + $0xf4] sm:$0xf]
    %v289 = vld [vmem:[#allocation10 + $0xf8] sm:$0xf]
    %v290 = vld [vmem:[#allocation10 + $0xfc] sm:$0xf]
    %v291 = vld [vmem:[%s4] sm:$0x1]
    %v293 = vperm.slane %v291, 0
    %v359 = vunpack.c.l.b16 %v227
    %v360 = vunpack.c.l.b16 %v228
    %v361 = vunpack.c.l.b16 %v229
    %v362 = vunpack.c.l.b16 %v230
    %v363 = vunpack.c.l.b16 %v231
    %v364 = vunpack.c.l.b16 %v232
    %v365 = vunpack.c.l.b16 %v233
    %v366 = vunpack.c.l.b16 %v234
    %v367 = vunpack.c.l.b16 %v235
    %v368 = vunpack.c.l.b16 %v236
    %v369 = vunpack.c.l.b16 %v237
    %v370 = vunpack.c.l.b16 %v238
    %v371 = vunpack.c.l.b16 %v239
    %v372 = vunpack.c.l.b16 %v240
    %v373 = vunpack.c.l.b16 %v241
    %v374 = vunpack.c.l.b16 %v242
    %v375 = vunpack.c.l.b16 %v243
    %v376 = vunpack.c.l.b16 %v244
    %v377 = vunpack.c.l.b16 %v245
    %v378 = vunpack.c.l.b16 %v246
    %v379 = vunpack.c.l.b16 %v247
    %v380 = vunpack.c.l.b16 %v248
    %v381 = vunpack.c.l.b16 %v249
    %v382 = vunpack.c.l.b16 %v250
    %v383 = vunpack.c.l.b16 %v251
    %v384 = vunpack.c.l.b16 %v252
    %v385 = vunpack.c.l.b16 %v253
    %v386 = vunpack.c.l.b16 %v254
    %v387 = vunpack.c.l.b16 %v255
    %v388 = vunpack.c.l.b16 %v256
    %v389 = vunpack.c.l.b16 %v257
    %v390 = vunpack.c.l.b16 %v258
    %v391 = vunpack.c.l.b16 %v259
    %v392 = vunpack.c.l.b16 %v260
    %v393 = vunpack.c.l.b16 %v261
    %v394 = vunpack.c.l.b16 %v262
    %v395 = vunpack.c.l.b16 %v263
    %v396 = vunpack.c.l.b16 %v264
    %v397 = vunpack.c.l.b16 %v265
    %v398 = vunpack.c.l.b16 %v266
    %v399 = vunpack.c.l.b16 %v267
    %v400 = vunpack.c.l.b16 %v268
    %v401 = vunpack.c.l.b16 %v269
    %v402 = vunpack.c.l.b16 %v270
    %v403 = vunpack.c.l.b16 %v271
    %v404 = vunpack.c.l.b16 %v272
    %v405 = vunpack.c.l.b16 %v273
    %v406 = vunpack.c.l.b16 %v274
    %v407 = vunpack.c.l.b16 %v275
    %v408 = vunpack.c.l.b16 %v276
    %v409 = vunpack.c.l.b16 %v277
    %v410 = vunpack.c.l.b16 %v278
    %v411 = vunpack.c.l.b16 %v279
    %v412 = vunpack.c.l.b16 %v280
    %v413 = vunpack.c.l.b16 %v281
    %v414 = vunpack.c.l.b16 %v282
    %v415 = vunpack.c.l.b16 %v283
    %v416 = vunpack.c.l.b16 %v284
    %v417 = vunpack.c.l.b16 %v285
    %v418 = vunpack.c.l.b16 %v286
    %v419 = vunpack.c.l.b16 %v287
    %v420 = vunpack.c.l.b16 %v288
    %v421 = vunpack.c.l.b16 %v289
    %v422 = vunpack.c.l.b16 %v290
    %v423 = vpack.c.b16 %v360, %v359
    %v424 = vpack.c.b16 %v362, %v361
    %v425 = vpack.c.b16 %v364, %v363
    %v426 = vpack.c.b16 %v366, %v365
    %v427 = vpack.c.b16 %v368, %v367
    %v428 = vpack.c.b16 %v370, %v369
    %v429 = vpack.c.b16 %v372, %v371
    %v430 = vpack.c.b16 %v374, %v373
    %v431 = vpack.c.b16 %v376, %v375
    %v432 = vpack.c.b16 %v378, %v377
    %v433 = vpack.c.b16 %v380, %v379
    %v434 = vpack.c.b16 %v382, %v381
    %v435 = vpack.c.b16 %v384, %v383
    %v436 = vpack.c.b16 %v386, %v385
    %v437 = vpack.c.b16 %v388, %v387
    %v438 = vpack.c.b16 %v390, %v389
    %v439 = vpack.c.b16 %v392, %v391
    %v440 = vpack.c.b16 %v394, %v393
    %v441 = vpack.c.b16 %v396, %v395
    %v442 = vpack.c.b16 %v398, %v397
    %v443 = vpack.c.b16 %v400, %v399
    %v444 = vpack.c.b16 %v402, %v401
    %v445 = vpack.c.b16 %v404, %v403
    %v446 = vpack.c.b16 %v406, %v405
    %v447 = vpack.c.b16 %v408, %v407
    %v448 = vpack.c.b16 %v410, %v409
    %v449 = vpack.c.b16 %v412, %v411
    %v450 = vpack.c.b16 %v414, %v413
    %v451 = vpack.c.b16 %v416, %v415
    %v452 = vpack.c.b16 %v418, %v417
    %v453 = vpack.c.b16 %v420, %v419
    %v454 = vpack.c.b16 %v422, %v421
    %487 = vmatpush.bf16.msra.mxu0 %v430
    %488 = vmatpush.bf16.msra.mxu0 %v429
    %489 = vmatpush.bf16.msra.mxu0 %v428
    %490 = vmatpush.bf16.msra.mxu0 %v427
    %491 = vmatpush.bf16.msra.mxu0 %v426
    %492 = vmatpush.bf16.msra.mxu0 %v425
    %493 = vmatpush.bf16.msra.mxu0 %v424
    %494 = vmatpush.bf16.msra.mxu0 %v423
    %495 = vmatmul.bf16.gmra.mxu0 %v223
    %v496 = vpop.f32.mrf.mxu0
    %v497 = vadd.f32 %v293, %v496
    %v498 = vpop.f32.mrf.mxu0
    %v499 = vadd.f32 %v293, %v498
    %500 = vdwg.mxu0
    %501 = vmatpush.bf16.msra.mxu0 %v438
    %502 = vmatpush.bf16.msra.mxu0 %v437
    %503 = vmatpush.bf16.msra.mxu0 %v436
    %504 = vmatpush.bf16.msra.mxu0 %v435
    %505 = vmatpush.bf16.msra.mxu0 %v434
    %506 = vmatpush.bf16.msra.mxu0 %v433
    %507 = vmatpush.bf16.msra.mxu0 %v432
    %508 = vmatpush.bf16.msra.mxu0 %v431
    %509 = vmatmul.bf16.gmra.mxu0 %v224
    %v510 = vpop.f32.mrf.mxu0
    %v511 = vadd.f32 %v497, %v510
    %v512 = vpop.f32.mrf.mxu0
    %v513 = vadd.f32 %v499, %v512
    %514 = vdwg.mxu0
    %515 = vmatpush.bf16.msra.mxu0 %v446
    %516 = vmatpush.bf16.msra.mxu0 %v445
    %517 = vmatpush.bf16.msra.mxu0 %v444
    %518 = vmatpush.bf16.msra.mxu0 %v443
    %519 = vmatpush.bf16.msra.mxu0 %v442
    %520 = vmatpush.bf16.msra.mxu0 %v441
    %521 = vmatpush.bf16.msra.mxu0 %v440
    %522 = vmatpush.bf16.msra.mxu0 %v439
    %523 = vmatmul.bf16.gmra.mxu0 %v225
    %v524 = vpop.f32.mrf.mxu0
    %v525 = vadd.f32 %v511, %v524
    %v526 = vpop.f32.mrf.mxu0
    %v527 = vadd.f32 %v513, %v526
    %528 = vdwg.mxu0
    %529 = vmatpush.bf16.msra.mxu0 %v454
    %530 = vmatpush.bf16.msra.mxu0 %v453
    %531 = vmatpush.bf16.msra.mxu0 %v452
    %532 = vmatpush.bf16.msra.mxu0 %v451
    %533 = vmatpush.bf16.msra.mxu0 %v450
    %534 = vmatpush.bf16.msra.mxu0 %v449
    %535 = vmatpush.bf16.msra.mxu0 %v448
    %536 = vmatpush.bf16.msra.mxu0 %v447
    %537 = vmatmul.bf16.gmra.mxu0 %v226
    %v538 = vpop.f32.mrf.mxu0
    %v539 = vadd.f32 %v525, %v538
    %v540 = vpop.f32.mrf.mxu0
    %v541 = vadd.f32 %v527, %v540
    %542 = vdwg.mxu0
    %v543 = vmax.f32 %v539, 0.0
    %v544 = vmax.f32 %v541, 0.0
    %v545 = vld [vmem:[%s5] sm:$0x1]
    %v547 = vperm.slane %v545, 0
    %v549 = vmul.f32 %v543, %v547
    %v550 = vmul.f32 %v544, %v547
    %551 = vadd.xlane.f32.xlu0 %v549
    %v552 = vpop.xlane.xlu0 %551
    %553 = vadd.xlane.f32.xlu0 %v550
    %v554 = vpop.xlane.xlu0 %553
    %s555 = sld [smem:[#allocation3]]
    %v556 = vstv %s555
    %v557 = vadd.f32 %v552, %v556
    %v558 = vadd.f32 %v554, %v556
    %vm559 = vcmask 7168
    %560 = vst.msk [vmem:[#allocation2] sm:$0xff] %vm559, %v557
    %561 = vst.msk [vmem:[#allocation2 + $0x8] sm:$0xff] %vm559, %v558
    %v562 = vld [vmem:[#allocation2] ss:$8 sm:$0x3]
    %s563 = scalar_lea.vmem [#allocation2], 1
    %v564 = vld [vmem:[%s563] ss:$8 sm:$0x3]
    %s565 = scalar_lea.vmem [#allocation2], 2
    %v566 = vld [vmem:[%s565] ss:$8 sm:$0x3]
    %s567 = scalar_lea.vmem [#allocation2], 3
    %v568 = vld [vmem:[%s567] ss:$8 sm:$0x3]
    %s569 = scalar_lea.vmem [#allocation2], 4
    %v570 = vld [vmem:[%s569] ss:$8 sm:$0x3]
    %s571 = scalar_lea.vmem [#allocation2], 5
    %v572 = vld [vmem:[%s571] ss:$8 sm:$0x3]
    %s573 = scalar_lea.vmem [#allocation2], 6
    %v574 = vld [vmem:[%s573] ss:$8 sm:$0x3]
    %s575 = scalar_lea.vmem [#allocation2], 7
    %v576 = vld [vmem:[%s575] ss:$8 sm:$0x3]
    %578 = vrot.lane.b32.xlu0 %v564, 1
    %v579 = vpop.permute.xlu0 %578
    %582 = vrot.lane.b32.xlu0 %v566, 2
    %v583 = vpop.permute.xlu0 %582
    %586 = vrot.lane.b32.xlu0 %v568, 3
    %v587 = vpop.permute.xlu0 %586
    %590 = vrot.lane.b32.xlu0 %v570, 4
    %v591 = vpop.permute.xlu0 %590
    %594 = vrot.lane.b32.xlu0 %v572, 5
    %v595 = vpop.permute.xlu0 %594
    %598 = vrot.lane.b32.xlu0 %v574, 6
    %v599 = vpop.permute.xlu0 %598
    %602 = vrot.lane.b32.xlu0 %v576, 7
    %v603 = vpop.permute.xlu0 %602
    %v605 = vsel %vm559, %v562, %v579
    %vm606 = vcmask 15360
    %v607 = vsel %vm606, %v605, %v583
    %vm608 = vcmask 23552
    %v609 = vsel %vm608, %v607, %v587
    %vm610 = vcmask 31744
    %v611 = vsel %vm610, %v609, %v591
    %vm612 = vcmask 39936
    %v613 = vsel %vm612, %v611, %v595
    %vm614 = vcmask 48128
    %v615 = vsel %vm614, %v613, %v599
    %vm616 = vcmask 56320
    %v617 = vsel %vm616, %v615, %v603
    %vm618 = vcmask 58368
    %v619 = vsel %vm618, %v617, -inf
    %620 = vmax.xlane.f32.xlu0 %v619
    %v621 = vpop.xlane.xlu0 %620
    %v622 = vsub.f32 %v617, %v621
    %v623 = vmul.f32 %v622, 1.442695
    %v624 = vpow.pop %v623
    %v625 = vsel %vm618, %v624, 0.0
    %626 = vadd.xlane.f32.xlu0 %v625
    %v627 = vpop.xlane.xlu0 %626
    %v628 = vrcp.pop %v627
    %v629 = vmul.f32 %v624, %v628
    %630 = vst.msk [vmem:[#allocation12] sm:$0x3] %vm618, %v629
    // Predicated region
    $region46: #{tpu_custom_call.1} parent=1 // pred_check
      _
    $region47: #{tpu_custom_call.1} parent=1 // pred_check_branch
      %632 = sbr.rel (0) target = $region49
    $region48: #{tpu_custom_call.1} parent=1 // pred_region
      %634 = vsyncadd [#allocation6], 0
      %s636 = sshll.u32 [#allocation12], 4
      %s637 = int_to_ptr.vmem [resolvable:$true] %s636
      %s638 = sshll.u32 %s7, 4
      %s639 = int_to_ptr.hbm [resolvable:$true] %s638
      %641 = dma.vmem_to_hbm [thread:$0]  %s637, 32, %s639, [#allocation6]
    $region49: #{tpu_custom_call.1} parent=1 // pred_fallthru
      _
    // Predicated region
    $region50: #{tpu_custom_call.1} parent=1 // pred_check
      _
    $region51: #{tpu_custom_call.1} parent=1 // pred_check_branch
      %643 = sbr.rel (0) target = $region53
    $region52: #{tpu_custom_call.1} parent=1 // pred_region
      %645 = dma.done [#allocation6], 32
    $region53: #{tpu_custom_call.1} parent=1 // pred_fallthru
      _
    %646 = vsyncpa [#allocation5], 1
    %647 = vsyncpa [#allocation8], 1
    %648 = vsyncpa [#allocation11], 1
    %649 = vsyncpa [#allocation6], 1

</llo_original>
